<compile_context>
chip_gen: v5e
topology: v5e:2x2
jax: 0.10.0
libtpu: 0.0.40
codegen_flags: <defaults>
</compile_context>

<pallas_src>
import functools

import jax
import jax.numpy as jnp
from jax.experimental import pallas as pl
from jax.experimental.pallas import tpu as pltpu


LANE = 128  # TPU lane width; pad feature dims to multiples of this.


def _round_up(x, m):
    return (x + m - 1) // m * m


def _cdiv(a, b):
    return -(-a // b)


def _mlp_kernel(x_ref, w1_ref, b1_ref, w2_ref, b2_ref, o_ref):
    # Cast x f32 -> bf16 on the VPU (in VMEM), feed the MXU with f32 accumulate.
    x = x_ref[...].astype(jnp.bfloat16)                       # (TM, D)
    h = jnp.dot(x, w1_ref[...], preferred_element_type=jnp.float32)
    h = jnp.maximum(h + b1_ref[...], 0.0)                     # f32 bias + ReLU
    # Second matmul: bf16 in, f32 accumulate.
    out = jnp.dot(h.astype(jnp.bfloat16), w2_ref[...],
                  preferred_element_type=jnp.float32)
    # Lane-dense (TM, 128) store, bf16 to halve writeback traffic.
    o_ref[...] = (out + b2_ref[...]).astype(o_ref.dtype)


def prepare_params(w1, b1, w2, b2):
    """Pad hidden/output dims to lane width and cast weights to bf16 (once).

    w1: (input_dim, hidden)   -> (input_dim, Hp)  bf16
    b1: (hidden,)             -> (1, Hp)          f32
    w2: (hidden, output_dim)  -> (Hp, Op)         bf16
    b2: (output_dim,)         -> (1, Op)          f32

    Padding is numerically exact: padded bias entries are 0, relu(0)=0, and
    padded W2 rows/cols are 0, so padded lanes contribute nothing.
    """
    input_dim, hidden = w1.shape
    output_dim = w2.shape[1]
    hid_p = _round_up(hidden, LANE)
    out_p = _round_up(output_dim, LANE)

    w1p = jnp.zeros((input_dim, hid_p), jnp.float32).at[:, :hidden].set(w1)
    b1p = jnp.zeros((1, hid_p), jnp.float32).at[0, :hidden].set(b1)
    w2p = jnp.zeros((hid_p, out_p), jnp.float32).at[:hidden, :output_dim].set(w2)
    b2p = jnp.zeros((1, out_p), jnp.float32).at[0, :output_dim].set(b2)

    return (w1p.astype(jnp.bfloat16), b1p, w2p.astype(jnp.bfloat16), b2p)


@functools.partial(jax.jit, static_argnames=("output_dim", "tm"))
def simple_classifier_forward(x, params, *, output_dim, tm=1024):
    """Fused forward pass.  x: (B, input_dim) f32 -> (B, output_dim) f32."""
    w1p, b1p, w2p, b2p = params
    B, input_dim = x.shape
    hid_p = w1p.shape[1]
    out_p = w2p.shape[1]

    # ---- static (trace-time) batch-tile selection ----
    tm_eff = max(8, min(tm, _round_up(B, 8)))
    n_tiles = _cdiv(B, tm_eff)
    # v7x has 2 TensorCores: make sure the "parallel" batch axis has >= 2 grid
    # steps when there is enough work to split.
    if n_tiles == 1 and B >= 128:
        tm_eff = _round_up(_cdiv(B, 2), 8)
        n_tiles = _cdiv(B, tm_eff)
    # VMEM/step @ tm=1024: 2*3 MiB (x f32) + 2*0.25 MiB (out bf16)
    #                      + ~0.25 MiB weights + 0.5 MiB f32 h  ~= 7.5 MiB.
    # 32 MiB scoped limit leaves room for tm up to ~2048 even on v5e.

    cost = pl.CostEstimate(
        flops=2 * B * input_dim * hid_p + 2 * B * hid_p * out_p,
        transcendentals=0,
        bytes_accessed=(B * input_dim * 4            # x (f32, read once)
                        + w1p.size * 2 + b1p.size * 4
                        + w2p.size * 2 + b2p.size * 4
                        + B * out_p * 2))            # bf16 padded output

    out_padded = pl.pallas_call(
        _mlp_kernel,
        out_shape=jax.ShapeDtypeStruct((B, out_p), jnp.bfloat16),
        grid_spec=pl.GridSpec(
            grid=(n_tiles,),
            in_specs=[
                # x: tiled over batch (double-buffered by the pipeline);
                # partial last tile handled by Pallas edge-block masking.
                pl.BlockSpec((tm_eff, input_dim), lambda i: (i, 0)),
                # Weights / biases: constant block index -> VMEM-resident.
                pl.BlockSpec((input_dim, hid_p), lambda i: (0, 0)),
                pl.BlockSpec((1, hid_p), lambda i: (0, 0)),
                pl.BlockSpec((hid_p, out_p), lambda i: (0, 0)),
                pl.BlockSpec((1, out_p), lambda i: (0, 0)),
            ],
            out_specs=pl.BlockSpec((tm_eff, out_p), lambda i: (i, 0)),
        ),
        compiler_params=pltpu.CompilerParams(
            dimension_semantics=("parallel",),       # megacore sharding on v7x
            vmem_limit_bytes=32 * 1024 * 1024),      # covers v5e's 16 MiB default
        cost_estimate=cost,
    )(x, w1p, b1p, w2p, b2p)

    # Tiny static slice (B, output_dim); a fused consumer could take the padded
    # bf16 slab directly and skip this read entirely.
    return out_padded[:, :output_dim].astype(jnp.float32)


def init_params(key, input_dim=768, hidden_dim=50, output_dim=2):
    """Deterministic init mimicking nn.Linear's U(-1/sqrt(fan_in), 1/sqrt(fan_in))."""
    k1, k2, k3, k4 = jax.random.split(key, 4)
    lim1 = 1.0 / jnp.sqrt(jnp.float32(input_dim))
    lim2 = 1.0 / jnp.sqrt(jnp.float32(hidden_dim))
    w1 = jax.random.uniform(k1, (input_dim, hidden_dim), jnp.float32, -lim1, lim1)
    b1 = jax.random.uniform(k2, (hidden_dim,), jnp.float32, -lim1, lim1)
    w2 = jax.random.uniform(k3, (hidden_dim, output_dim), jnp.float32, -lim2, lim2)
    b2 = jax.random.uniform(k4, (output_dim,), jnp.float32, -lim2, lim2)
    return w1, b1, w2, b2


def _reference(x, w1, b1, w2, b2):
    # Pure-JAX f32 reference (kernel uses bf16 MXU inputs / bf16 output with
    # f32 accumulation, so compare with a tolerance covering bf16 rounding).
    h = jnp.maximum(x @ w1 + b1, 0.0)
    return h @ w2 + b2


if __name__ == "__main__":
    key = jax.random.PRNGKey(0)
    kx, kp, kx2 = jax.random.split(key, 3)

    batch, input_dim, hidden_dim, output_dim = 8, 768, 50, 2
    x = jax.random.normal(kx, (batch, input_dim), jnp.float32)
    w1, b1, w2, b2 = init_params(kp, input_dim, hidden_dim, output_dim)
    params = prepare_params(w1, b1, w2, b2)

    # Small batch: single grid step.
    out = simple_classifier_forward(x, params, output_dim=output_dim)
    out = jax.block_until_ready(out)
    ref = _reference(x, w1, b1, w2, b2)
    assert out.shape == (batch, output_dim)
    assert jnp.allclose(out, ref, atol=5e-2, rtol=5e-2), \
        f"max abs err {jnp.max(jnp.abs(out - ref))}"

    # Larger, non-tile-multiple batch: exercises multi-tile pipelining and the
    # masked edge block (no jnp.pad of x).
    batch2 = 300
    x2 = jax.random.normal(kx2, (batch2, input_dim), jnp.float32)
    out2 = jax.block_until_ready(
        simple_classifier_forward(x2, params, output_dim=output_dim, tm=256))
    ref2 = _reference(x2, w1, b1, w2, b2)
    assert out2.shape == (batch2, output_dim)
    assert jnp.allclose(out2, ref2, atol=5e-2, rtol=5e-2), \
        f"max abs err {jnp.max(jnp.abs(out2 - ref2))}"

    print("KERNEL_OK")
</pallas_src>

<mosaic_0001>
module attributes {stable_mosaic.version = 11 : i64} {
  func.func @_mlp_kernel(%arg0: i32, %arg1: memref<8x768xf32, #tpu.memory_space<vmem>>, %arg2: memref<768x128xbf16, #tpu.memory_space<vmem>>, %arg3: memref<1x128xf32, #tpu.memory_space<vmem>>, %arg4: memref<128x128xbf16, #tpu.memory_space<vmem>>, %arg5: memref<1x128xf32, #tpu.memory_space<vmem>>, %arg6: memref<8x128xbf16, #tpu.memory_space<vmem>>) attributes {dimension_semantics = [#tpu.dimension_semantics<parallel>], iteration_bounds = array<i64: 1>, scalar_prefetch = 0 : i64, scratch_operands = 0 : i64, tpu.core_type = #tpu.core_type<tc>, window_params = [{transform_indices = @transform_0, window_bounds = array<i64: 8, 768>}, {pipeline_mode = #tpu.pipeline_mode<synchronous>, transform_indices = @transform_1, window_bounds = array<i64: 768, 128>}, {pipeline_mode = #tpu.pipeline_mode<synchronous>, transform_indices = @transform_2, window_bounds = array<i64: 1, 128>}, {pipeline_mode = #tpu.pipeline_mode<synchronous>, transform_indices = @transform_3, window_bounds = array<i64: 128, 128>}, {pipeline_mode = #tpu.pipeline_mode<synchronous>, transform_indices = @transform_4, window_bounds = array<i64: 1, 128>}, {transform_indices = @transform_5, window_bounds = array<i64: 8, 128>}]} {
    %c0 = arith.constant 0 : index
    %c0_0 = arith.constant 0 : index
    %0 = vector.load %arg1[%c0, %c0_0] : memref<8x768xf32, #tpu.memory_space<vmem>>, vector<8x768xf32>
    %1 = arith.truncf %0 : vector<8x768xf32> to vector<8x768xbf16>
    %c0_1 = arith.constant 0 : index
    %c0_2 = arith.constant 0 : index
    %2 = vector.load %arg2[%c0_1, %c0_2] : memref<768x128xbf16, #tpu.memory_space<vmem>>, vector<768x128xbf16>
    %cst = arith.constant dense<0.000000e+00> : vector<8x128xf32>
    %3 = tpu.matmul %1, %2, %cst {dimension_numbers = #tpu.dot_dimension_numbers<[1], [0], [0], [1], [0, 0, 1, 1], [], []>} : vector<8x768xbf16>, vector<768x128xbf16>, vector<8x128xf32> -> vector<8x128xf32>
    %c0_3 = arith.constant 0 : index
    %c0_4 = arith.constant 0 : index
    %4 = vector.load %arg3[%c0_3, %c0_4] : memref<1x128xf32, #tpu.memory_space<vmem>>, vector<1x128xf32>
    %5 = vector.broadcast %4 : vector<1x128xf32> to vector<8x128xf32>
    %6 = arith.addf %3, %5 : vector<8x128xf32>
    %cst_5 = arith.constant 0.000000e+00 : f32
    %7 = vector.broadcast %cst_5 : f32 to vector<8x128xf32>
    %8 = arith.maximumf %6, %7 : vector<8x128xf32>
    %9 = arith.truncf %8 : vector<8x128xf32> to vector<8x128xbf16>
    %c0_6 = arith.constant 0 : index
    %c0_7 = arith.constant 0 : index
    %10 = vector.load %arg4[%c0_6, %c0_7] : memref<128x128xbf16, #tpu.memory_space<vmem>>, vector<128x128xbf16>
    %cst_8 = arith.constant dense<0.000000e+00> : vector<8x128xf32>
    %11 = tpu.matmul %9, %10, %cst_8 {dimension_numbers = #tpu.dot_dimension_numbers<[1], [0], [0], [1], [0, 0, 1, 1], [], []>} : vector<8x128xbf16>, vector<128x128xbf16>, vector<8x128xf32> -> vector<8x128xf32>
    %c0_9 = arith.constant 0 : index
    %c0_10 = arith.constant 0 : index
    %12 = vector.load %arg5[%c0_9, %c0_10] : memref<1x128xf32, #tpu.memory_space<vmem>>, vector<1x128xf32>
    %13 = vector.broadcast %12 : vector<1x128xf32> to vector<8x128xf32>
    %14 = arith.addf %11, %13 : vector<8x128xf32>
    %15 = arith.truncf %14 : vector<8x128xf32> to vector<8x128xbf16>
    %c0_11 = arith.constant 0 : index
    %c0_12 = arith.constant 0 : index
    %16 = vector.load %arg6[%c0_11, %c0_12] : memref<8x128xbf16, #tpu.memory_space<vmem>>, vector<8x128xbf16>
    tpu.vector_store %arg6[%c0_11, %c0_12], %15 {strides = array<i32>} : memref<8x128xbf16, #tpu.memory_space<vmem>>, vector<8x128xbf16>,
    return
  }
  func.func @transform_0(%arg0: i32) -> (i32, i32) {
    %c0_i32 = arith.constant 0 : i32
    %c0_i32_0 = arith.constant 0 : i32
    return %arg0, %c0_i32 : i32, i32
  }
  func.func @transform_1(%arg0: i32) -> (i32, i32) {
    %c0_i32 = arith.constant 0 : i32
    %c0_i32_0 = arith.constant 0 : i32
    %c0_i32_1 = arith.constant 0 : i32
    return %c0_i32, %c0_i32_0 : i32, i32
  }
  func.func @transform_2(%arg0: i32) -> (i32, i32) {
    %c0_i32 = arith.constant 0 : i32
    %c0_i32_0 = arith.constant 0 : i32
    %c0_i32_1 = arith.constant 0 : i32
    return %c0_i32, %c0_i32_0 : i32, i32
  }
  func.func @transform_3(%arg0: i32) -> (i32, i32) {
    %c0_i32 = arith.constant 0 : i32
    %c0_i32_0 = arith.constant 0 : i32
    %c0_i32_1 = arith.constant 0 : i32
    return %c0_i32, %c0_i32_0 : i32, i32
  }
  func.func @transform_4(%arg0: i32) -> (i32, i32) {
    %c0_i32 = arith.constant 0 : i32
    %c0_i32_0 = arith.constant 0 : i32
    %c0_i32_1 = arith.constant 0 : i32
    return %c0_i32, %c0_i32_0 : i32, i32
  }
  func.func @transform_5(%arg0: i32) -> (i32, i32) {
    %c0_i32 = arith.constant 0 : i32
    %c0_i32_0 = arith.constant 0 : i32
    return %arg0, %c0_i32 : i32, i32
  }
}

</mosaic_0001>

<llo_original>
// kernel: simple_classifier_forward.1
$region0: #{simple_classifier_forward.1}
  #allocation0 [shape = 'u32[]', space=smem, size = 0x4, offset = 0x4, fixed_abs, tag = 'smem constant byte address 0x4 - core index']
  #allocation1 [shape = 'u32[72,128]{1,0:T(1,128)}', space=vmem, size = 0x9000, scoped, tag = 'internal scratch']
  %s0 = inlined_call_operand.hbm [shape: f32[8,768], index: 0, kind: input, shape index: {}]
  %s1 = inlined_call_operand.hbm [shape: bf16[768,128], index: 1, kind: input, shape index: {}]
  %s2 = inlined_call_operand.vmem [shape: f32[1,128], index: 2, kind: input, shape index: {}]
  %s3 = inlined_call_operand.hbm [shape: bf16[128,128], index: 3, kind: input, shape index: {}]
  %s4 = inlined_call_operand.vmem [shape: f32[1,128], index: 4, kind: input, shape index: {}]
  %s5 = inlined_call_operand.vmem [shape: bf16[8,128], index: 5, kind: output, shape index: {}]
  %s6 = sld [smem:[#allocation0]]
  $region42: #{simple_classifier_forward.1} parent=0
    _
  %s8 = ssub.s32 1, %s6
  %s9 = scalar_select 0, %s8, %s6
  $region1: #{simple_classifier_forward.1} parent=0
    #allocation2 [shape = 'u8[24576]{0}', space=vmem, size = 0x6000, scoped, tag = 'input window, operand 0, single buffered']
    #allocation3 [shape = 's32[1]{0}', space=sflag, size = 0x4, scoped, tag = 'scoped memory for simple_classifier_forward.1']
    #allocation4 [shape = 'u8[196608]{0}', space=vmem, size = 0x30000, scoped, tag = 'input window, operand 1, single buffered']
    #allocation5 [shape = 's32[1]{0}', space=sflag, size = 0x4, scoped, tag = 'scoped memory for simple_classifier_forward.1']
    #allocation6 [shape = 'u8[32768]{0}', space=vmem, size = 0x8000, scoped, tag = 'input window, operand 3, single buffered']
    %10 = vsyncpa [#allocation3], 0
    %11 = vsyncpa [#allocation5], 0
    // Predicated region
    $region2: #{simple_classifier_forward.1} parent=1 // pred_check
      _
    $region3: #{simple_classifier_forward.1} parent=1 // pred_check_branch
      %13 = sbr.rel (0) target = $region5
    $region4: #{simple_classifier_forward.1} parent=1 // pred_region
      %15 = vsyncadd [#allocation3], 0
      %s17 = sshll.u32 %s0, 4
      %s18 = int_to_ptr.hbm [resolvable:$true] %s17
      %s19 = sshll.u32 [#allocation2], 4
      %s20 = int_to_ptr.vmem [resolvable:$true] %s19
      %22 = dma.hbm_to_vmem [thread:$0]  %s18, 768, %s20, [#allocation3]
    $region5: #{simple_classifier_forward.1} parent=1 // pred_fallthru
      _
    // Predicated region
    $region6: #{simple_classifier_forward.1} parent=1 // pred_check
      _
    $region7: #{simple_classifier_forward.1} parent=1 // pred_check_branch
      %24 = sbr.rel (0) target = $region9
    $region8: #{simple_classifier_forward.1} parent=1 // pred_region
      %26 = vsyncadd [#allocation5], 0
      %s27 = sshll.u32 %s1, 4
      %s28 = int_to_ptr.hbm [resolvable:$true] %s27
      %s29 = sshll.u32 [#allocation4], 4
      %s30 = int_to_ptr.vmem [resolvable:$true] %s29
      %35 = dma.hbm_to_vmem [thread:$0]  %s28, 6144, %s30, [#allocation5], 64, 64, 4
    $region9: #{simple_classifier_forward.1} parent=1 // pred_fallthru
      _
    // Predicated region
    $region10: #{simple_classifier_forward.1} parent=1 // pred_check
      _
    $region11: #{simple_classifier_forward.1} parent=1 // pred_check_branch
      %37 = sbr.rel (0) target = $region13
    $region12: #{simple_classifier_forward.1} parent=1 // pred_region
      _
    $region13: #{simple_classifier_forward.1} parent=1 // pred_fallthru
      _
    // Predicated region
    $region14: #{simple_classifier_forward.1} parent=1 // pred_check
      _
    $region15: #{simple_classifier_forward.1} parent=1 // pred_check_branch
      %39 = sbr.rel (0) target = $region17
    $region16: #{simple_classifier_forward.1} parent=1 // pred_region
      %41 = vsyncadd [#allocation5], 0
      %s42 = sshll.u32 %s3, 4
      %s43 = int_to_ptr.hbm [resolvable:$true] %s42
      %s44 = sshll.u32 [#allocation6], 4
      %s45 = int_to_ptr.vmem [resolvable:$true] %s44
      %50 = dma.hbm_to_vmem [thread:$0]  %s43, 1024, %s45, [#allocation5], 64, 64, 4
    $region17: #{simple_classifier_forward.1} parent=1 // pred_fallthru
      _
    // Predicated region
    $region18: #{simple_classifier_forward.1} parent=1 // pred_check
      _
    $region19: #{simple_classifier_forward.1} parent=1 // pred_check_branch
      %52 = sbr.rel (0) target = $region21
    $region20: #{simple_classifier_forward.1} parent=1 // pred_region
      _
    $region21: #{simple_classifier_forward.1} parent=1 // pred_fallthru
      _
    // Predicated region
    $region22: #{simple_classifier_forward.1} parent=1 // pred_check
      _
    $region23: #{simple_classifier_forward.1} parent=1 // pred_check_branch
      %54 = sbr.rel (0) target = $region25
    $region24: #{simple_classifier_forward.1} parent=1 // pred_region
      %56 = dma.done [#allocation3], 768
    $region25: #{simple_classifier_forward.1} parent=1 // pred_fallthru
      _
    // Predicated region
    $region26: #{simple_classifier_forward.1} parent=1 // pred_check
      _
    $region27: #{simple_classifier_forward.1} parent=1 // pred_check_branch
      %58 = sbr.rel (0) target = $region29
    $region28: #{simple_classifier_forward.1} parent=1 // pred_region
      %60 = dma.done [#allocation5], 6144
    $region29: #{simple_classifier_forward.1} parent=1 // pred_fallthru
      _
    // Predicated region
    $region30: #{simple_classifier_forward.1} parent=1 // pred_check
      _
    $region31: #{simple_classifier_forward.1} parent=1 // pred_check_branch
      %62 = sbr.rel (0) target = $region33
    $region32: #{simple_classifier_forward.1} parent=1 // pred_region
      %64 = dma.done [#allocation5], 1024
    $region33: #{simple_classifier_forward.1} parent=1 // pred_fallthru
      _
    %v65 = vld [vmem:[#allocation2] sm:$0xff]
    %v66 = vld [vmem:[#allocation2 + $0x8] sm:$0xff]
    %v67 = vld [vmem:[#allocation2 + $0x10] sm:$0xff]
    %v68 = vld [vmem:[#allocation2 + $0x18] sm:$0xff]
    %v69 = vld [vmem:[#allocation2 + $0x20] sm:$0xff]
    %v70 = vld [vmem:[#allocation2 + $0x28] sm:$0xff]
    %v71 = vpack.c.bf16 %v65, %v65
    %v72 = vpack.c.bf16 %v66, %v66
    %v73 = vpack.c.bf16 %v67, %v67
    %v74 = vpack.c.bf16 %v68, %v68
    %v75 = vpack.c.bf16 %v69, %v69
    %v76 = vpack.c.bf16 %v70, %v70
    %v77 = vld [vmem:[#allocation4] sm:$0xf]
    %v78 = vld [vmem:[#allocation4 + $0x4] sm:$0xf]
    %v79 = vld [vmem:[#allocation4 + $0x8] sm:$0xf]
    %v80 = vld [vmem:[#allocation4 + $0xc] sm:$0xf]
    %v81 = vld [vmem:[#allocation4 + $0x10] sm:$0xf]
    %v82 = vld [vmem:[#allocation4 + $0x14] sm:$0xf]
    %v83 = vld [vmem:[#allocation4 + $0x18] sm:$0xf]
    %v84 = vld [vmem:[#allocation4 + $0x1c] sm:$0xf]
    %v85 = vld [vmem:[#allocation4 + $0x20] sm:$0xf]
    %v86 = vld [vmem:[#allocation4 + $0x24] sm:$0xf]
    %v87 = vld [vmem:[#allocation4 + $0x28] sm:$0xf]
    %v88 = vld [vmem:[#allocation4 + $0x2c] sm:$0xf]
    %v89 = vld [vmem:[#allocation4 + $0x30] sm:$0xf]
    %v90 = vld [vmem:[#allocation4 + $0x34] sm:$0xf]
    %v91 = vld [vmem:[#allocation4 + $0x38] sm:$0xf]
    %v92 = vld [vmem:[#allocation4 + $0x3c] sm:$0xf]
    %v93 = vld [vmem:[#allocation4 + $0x40] sm:$0xf]
    %v94 = vld [vmem:[#allocation4 + $0x44] sm:$0xf]
    %v95 = vld [vmem:[#allocation4 + $0x48] sm:$0xf]
    %v96 = vld [vmem:[#allocation4 + $0x4c] sm:$0xf]
    %v97 = vld [vmem:[#allocation4 + $0x50] sm:$0xf]
    %v98 = vld [vmem:[#allocation4 + $0x54] sm:$0xf]
    %v99 = vld [vmem:[#allocation4 + $0x58] sm:$0xf]
    %v100 = vld [vmem:[#allocation4 + $0x5c] sm:$0xf]
    %v101 = vld [vmem:[#allocation4 + $0x60] sm:$0xf]
    %v102 = vld [vmem:[#allocation4 + $0x64] sm:$0xf]
    %v103 = vld [vmem:[#allocation4 + $0x68] sm:$0xf]
    %v104 = vld [vmem:[#allocation4 + $0x6c] sm:$0xf]
    %v105 = vld [vmem:[#allocation4 + $0x70] sm:$0xf]
    %v106 = vld [vmem:[#allocation4 + $0x74] sm:$0xf]
    %v107 = vld [vmem:[#allocation4 + $0x78] sm:$0xf]
    %v108 = vld [vmem:[#allocation4 + $0x7c] sm:$0xf]
    %v109 = vld [vmem:[#allocation4 + $0x80] sm:$0xf]
    %v110 = vld [vmem:[#allocation4 + $0x84] sm:$0xf]
    %v111 = vld [vmem:[#allocation4 + $0x88] sm:$0xf]
    %v112 = vld [vmem:[#allocation4 + $0x8c] sm:$0xf]
    %v113 = vld [vmem:[#allocation4 + $0x90] sm:$0xf]
    %v114 = vld [vmem:[#allocation4 + $0x94] sm:$0xf]
    %v115 = vld [vmem:[#allocation4 + $0x98] sm:$0xf]
    %v116 = vld [vmem:[#allocation4 + $0x9c] sm:$0xf]
    %v117 = vld [vmem:[#allocation4 + $0xa0] sm:$0xf]
    %v118 = vld [vmem:[#allocation4 + $0xa4] sm:$0xf]
    %v119 = vld [vmem:[#allocation4 + $0xa8] sm:$0xf]
    %v120 = vld [vmem:[#allocation4 + $0xac] sm:$0xf]
    %v121 = vld [vmem:[#allocation4 + $0xb0] sm:$0xf]
    %v122 = vld [vmem:[#allocation4 + $0xb4] sm:$0xf]
    %v123 = vld [vmem:[#allocation4 + $0xb8] sm:$0xf]
    %v124 = vld [vmem:[#allocation4 + $0xbc] sm:$0xf]
    %v125 = vld [vmem:[#allocation4 + $0xc0] sm:$0xf]
    %v126 = vld [vmem:[#allocation4 + $0xc4] sm:$0xf]
    %v127 = vld [vmem:[#allocation4 + $0xc8] sm:$0xf]
    %v128 = vld [vmem:[#allocation4 + $0xcc] sm:$0xf]
    %v129 = vld [vmem:[#allocation4 + $0xd0] sm:$0xf]
    %v130 = vld [vmem:[#allocation4 + $0xd4] sm:$0xf]
    %v131 = vld [vmem:[#allocation4 + $0xd8] sm:$0xf]
    %v132 = vld [vmem:[#allocation4 + $0xdc] sm:$0xf]
    %v133 = vld [vmem:[#allocation4 + $0xe0] sm:$0xf]
    %v134 = vld [vmem:[#allocation4 + $0xe4] sm:$0xf]
    %v135 = vld [vmem:[#allocation4 + $0xe8] sm:$0xf]
    %v136 = vld [vmem:[#allocation4 + $0xec] sm:$0xf]
    %v137 = vld [vmem:[#allocation4 + $0xf0] sm:$0xf]
    %v138 = vld [vmem:[#allocation4 + $0xf4] sm:$0xf]
    %v139 = vld [vmem:[#allocation4 + $0xf8] sm:$0xf]
    %v140 = vld [vmem:[#allocation4 + $0xfc] sm:$0xf]
    %v141 = vld [vmem:[#allocation4 + $0x100] sm:$0xf]
    %v142 = vld [vmem:[#allocation4 + $0x104] sm:$0xf]
    %v143 = vld [vmem:[#allocation4 + $0x108] sm:$0xf]
    %v144 = vld [vmem:[#allocation4 + $0x10c] sm:$0xf]
    %v145 = vld [vmem:[#allocation4 + $0x110] sm:$0xf]
    %v146 = vld [vmem:[#allocation4 + $0x114] sm:$0xf]
    %v147 = vld [vmem:[#allocation4 + $0x118] sm:$0xf]
    %v148 = vld [vmem:[#allocation4 + $0x11c] sm:$0xf]
    %v149 = vld [vmem:[#allocation4 + $0x120] sm:$0xf]
    %v150 = vld [vmem:[#allocation4 + $0x124] sm:$0xf]
    %v151 = vld [vmem:[#allocation4 + $0x128] sm:$0xf]
    %v152 = vld [vmem:[#allocation4 + $0x12c] sm:$0xf]
    %v153 = vld [vmem:[#allocation4 + $0x130] sm:$0xf]
    %v154 = vld [vmem:[#allocation4 + $0x134] sm:$0xf]
    %v155 = vld [vmem:[#allocation4 + $0x138] sm:$0xf]
    %v156 = vld [vmem:[#allocation4 + $0x13c] sm:$0xf]
    %v157 = vld [vmem:[#allocation4 + $0x140] sm:$0xf]
    %v158 = vld [vmem:[#allocation4 + $0x144] sm:$0xf]
    %v159 = vld [vmem:[#allocation4 + $0x148] sm:$0xf]
    %v160 = vld [vmem:[#allocation4 + $0x14c] sm:$0xf]
    %v161 = vld [vmem:[#allocation4 + $0x150] sm:$0xf]
    %v162 = vld [vmem:[#allocation4 + $0x154] sm:$0xf]
    %v163 = vld [vmem:[#allocation4 + $0x158] sm:$0xf]
    %v164 = vld [vmem:[#allocation4 + $0x15c] sm:$0xf]
    %v165 = vld [vmem:[#allocation4 + $0x160] sm:$0xf]
    %v166 = vld [vmem:[#allocation4 + $0x164] sm:$0xf]
    %v167 = vld [vmem:[#allocation4 + $0x168] sm:$0xf]
    %v168 = vld [vmem:[#allocation4 + $0x16c] sm:$0xf]
    %v169 = vld [vmem:[#allocation4 + $0x170] sm:$0xf]
    %v170 = vld [vmem:[#allocation4 + $0x174] sm:$0xf]
    %v171 = vld [vmem:[#allocation4 + $0x178] sm:$0xf]
    %v172 = vld [vmem:[#allocation4 + $0x17c] sm:$0xf]
    %v173 = vld [vmem:[%s2] sm:$0x1]
    %v175 = vperm.slane %v173, 0
    %v273 = vunpack.c.l.b16 %v77
    %v274 = vunpack.c.l.b16 %v78
    %v275 = vunpack.c.l.b16 %v79
    %v276 = vunpack.c.l.b16 %v80
    %v277 = vunpack.c.l.b16 %v81
    %v278 = vunpack.c.l.b16 %v82
    %v279 = vunpack.c.l.b16 %v83
    %v280 = vunpack.c.l.b16 %v84
    %v281 = vunpack.c.l.b16 %v85
    %v282 = vunpack.c.l.b16 %v86
    %v283 = vunpack.c.l.b16 %v87
    %v284 = vunpack.c.l.b16 %v88
    %v285 = vunpack.c.l.b16 %v89
    %v286 = vunpack.c.l.b16 %v90
    %v287 = vunpack.c.l.b16 %v91
    %v288 = vunpack.c.l.b16 %v92
    %v289 = vunpack.c.l.b16 %v93
    %v290 = vunpack.c.l.b16 %v94
    %v291 = vunpack.c.l.b16 %v95
    %v292 = vunpack.c.l.b16 %v96
    %v293 = vunpack.c.l.b16 %v97
    %v294 = vunpack.c.l.b16 %v98
    %v295 = vunpack.c.l.b16 %v99
    %v296 = vunpack.c.l.b16 %v100
    %v297 = vunpack.c.l.b16 %v101
    %v298 = vunpack.c.l.b16 %v102
    %v299 = vunpack.c.l.b16 %v103
    %v300 = vunpack.c.l.b16 %v104
    %v301 = vunpack.c.l.b16 %v105
    %v302 = vunpack.c.l.b16 %v106
    %v303 = vunpack.c.l.b16 %v107
    %v304 = vunpack.c.l.b16 %v108
    %v305 = vunpack.c.l.b16 %v109
    %v306 = vunpack.c.l.b16 %v110
    %v307 = vunpack.c.l.b16 %v111
    %v308 = vunpack.c.l.b16 %v112
    %v309 = vunpack.c.l.b16 %v113
    %v310 = vunpack.c.l.b16 %v114
    %v311 = vunpack.c.l.b16 %v115
    %v312 = vunpack.c.l.b16 %v116
    %v313 = vunpack.c.l.b16 %v117
    %v314 = vunpack.c.l.b16 %v118
    %v315 = vunpack.c.l.b16 %v119
    %v316 = vunpack.c.l.b16 %v120
    %v317 = vunpack.c.l.b16 %v121
    %v318 = vunpack.c.l.b16 %v122
    %v319 = vunpack.c.l.b16 %v123
    %v320 = vunpack.c.l.b16 %v124
    %v321 = vunpack.c.l.b16 %v125
    %v322 = vunpack.c.l.b16 %v126
    %v323 = vunpack.c.l.b16 %v127
    %v324 = vunpack.c.l.b16 %v128
    %v325 = vunpack.c.l.b16 %v129
    %v326 = vunpack.c.l.b16 %v130
    %v327 = vunpack.c.l.b16 %v131
    %v328 = vunpack.c.l.b16 %v132
    %v329 = vunpack.c.l.b16 %v133
    %v330 = vunpack.c.l.b16 %v134
    %v331 = vunpack.c.l.b16 %v135
    %v332 = vunpack.c.l.b16 %v136
    %v333 = vunpack.c.l.b16 %v137
    %v334 = vunpack.c.l.b16 %v138
    %v335 = vunpack.c.l.b16 %v139
    %v336 = vunpack.c.l.b16 %v140
    %v337 = vunpack.c.l.b16 %v141
    %v338 = vunpack.c.l.b16 %v142
    %v339 = vunpack.c.l.b16 %v143
    %v340 = vunpack.c.l.b16 %v144
    %v341 = vunpack.c.l.b16 %v145
    %v342 = vunpack.c.l.b16 %v146
    %v343 = vunpack.c.l.b16 %v147
    %v344 = vunpack.c.l.b16 %v148
    %v345 = vunpack.c.l.b16 %v149
    %v346 = vunpack.c.l.b16 %v150
    %v347 = vunpack.c.l.b16 %v151
    %v348 = vunpack.c.l.b16 %v152
    %v349 = vunpack.c.l.b16 %v153
    %v350 = vunpack.c.l.b16 %v154
    %v351 = vunpack.c.l.b16 %v155
    %v352 = vunpack.c.l.b16 %v156
    %v353 = vunpack.c.l.b16 %v157
    %v354 = vunpack.c.l.b16 %v158
    %v355 = vunpack.c.l.b16 %v159
    %v356 = vunpack.c.l.b16 %v160
    %v357 = vunpack.c.l.b16 %v161
    %v358 = vunpack.c.l.b16 %v162
    %v359 = vunpack.c.l.b16 %v163
    %v360 = vunpack.c.l.b16 %v164
    %v361 = vunpack.c.l.b16 %v165
    %v362 = vunpack.c.l.b16 %v166
    %v363 = vunpack.c.l.b16 %v167
    %v364 = vunpack.c.l.b16 %v168
    %v365 = vunpack.c.l.b16 %v169
    %v366 = vunpack.c.l.b16 %v170
    %v367 = vunpack.c.l.b16 %v171
    %v368 = vunpack.c.l.b16 %v172
    %v369 = vpack.c.b16 %v274, %v273
    %v370 = vpack.c.b16 %v276, %v275
    %v371 = vpack.c.b16 %v278, %v277
    %v372 = vpack.c.b16 %v280, %v279
    %v373 = vpack.c.b16 %v282, %v281
    %v374 = vpack.c.b16 %v284, %v283
    %v375 = vpack.c.b16 %v286, %v285
    %v376 = vpack.c.b16 %v288, %v287
    %v377 = vpack.c.b16 %v290, %v289
    %v378 = vpack.c.b16 %v292, %v291
    %v379 = vpack.c.b16 %v294, %v293
    %v380 = vpack.c.b16 %v296, %v295
    %v381 = vpack.c.b16 %v298, %v297
    %v382 = vpack.c.b16 %v300, %v299
    %v383 = vpack.c.b16 %v302, %v301
    %v384 = vpack.c.b16 %v304, %v303
    %v385 = vpack.c.b16 %v306, %v305
    %v386 = vpack.c.b16 %v308, %v307
    %v387 = vpack.c.b16 %v310, %v309
    %v388 = vpack.c.b16 %v312, %v311
    %v389 = vpack.c.b16 %v314, %v313
    %v390 = vpack.c.b16 %v316, %v315
    %v391 = vpack.c.b16 %v318, %v317
    %v392 = vpack.c.b16 %v320, %v319
    %v393 = vpack.c.b16 %v322, %v321
    %v394 = vpack.c.b16 %v324, %v323
    %v395 = vpack.c.b16 %v326, %v325
    %v396 = vpack.c.b16 %v328, %v327
    %v397 = vpack.c.b16 %v330, %v329
    %v398 = vpack.c.b16 %v332, %v331
    %v399 = vpack.c.b16 %v334, %v333
    %v400 = vpack.c.b16 %v336, %v335
    %v401 = vpack.c.b16 %v338, %v337
    %v402 = vpack.c.b16 %v340, %v339
    %v403 = vpack.c.b16 %v342, %v341
    %v404 = vpack.c.b16 %v344, %v343
    %v405 = vpack.c.b16 %v346, %v345
    %v406 = vpack.c.b16 %v348, %v347
    %v407 = vpack.c.b16 %v350, %v349
    %v408 = vpack.c.b16 %v352, %v351
    %v409 = vpack.c.b16 %v354, %v353
    %v410 = vpack.c.b16 %v356, %v355
    %v411 = vpack.c.b16 %v358, %v357
    %v412 = vpack.c.b16 %v360, %v359
    %v413 = vpack.c.b16 %v362, %v361
    %v414 = vpack.c.b16 %v364, %v363
    %v415 = vpack.c.b16 %v366, %v365
    %v416 = vpack.c.b16 %v368, %v367
    %465 = vmatpush.bf16.msra.mxu0 %v376
    %466 = vmatpush.bf16.msra.mxu0 %v375
    %467 = vmatpush.bf16.msra.mxu0 %v374
    %468 = vmatpush.bf16.msra.mxu0 %v373
    %469 = vmatpush.bf16.msra.mxu0 %v372
    %470 = vmatpush.bf16.msra.mxu0 %v371
    %471 = vmatpush.bf16.msra.mxu0 %v370
    %472 = vmatpush.bf16.msra.mxu0 %v369
    %473 = vmatmul.bf16.gmra.mxu0 %v71
    %v474 = vpop.f32.mrf.mxu0
    %v475 = vadd.f32 %v175, %v474
    %v476 = vpop.f32.mrf.mxu0
    %477 = vdwg.mxu0
    %478 = vmatpush.bf16.msra.mxu0 %v384
    %479 = vmatpush.bf16.msra.mxu0 %v383
    %480 = vmatpush.bf16.msra.mxu0 %v382
    %481 = vmatpush.bf16.msra.mxu0 %v381
    %482 = vmatpush.bf16.msra.mxu0 %v380
    %483 = vmatpush.bf16.msra.mxu0 %v379
    %484 = vmatpush.bf16.msra.mxu0 %v378
    %485 = vmatpush.bf16.msra.mxu0 %v377
    %486 = vmatmul.bf16.gmra.mxu0 %v72
    %v487 = vpop.f32.mrf.mxu0
    %v488 = vadd.f32 %v475, %v487
    %v489 = vpop.f32.mrf.mxu0
    %490 = vdwg.mxu0
    %491 = vmatpush.bf16.msra.mxu0 %v392
    %492 = vmatpush.bf16.msra.mxu0 %v391
    %493 = vmatpush.bf16.msra.mxu0 %v390
    %494 = vmatpush.bf16.msra.mxu0 %v389
    %495 = vmatpush.bf16.msra.mxu0 %v388
    %496 = vmatpush.bf16.msra.mxu0 %v387
    %497 = vmatpush.bf16.msra.mxu0 %v386
    %498 = vmatpush.bf16.msra.mxu0 %v385
    %499 = vmatmul.bf16.gmra.mxu0 %v73
    %v500 = vpop.f32.mrf.mxu0
    %v501 = vadd.f32 %v488, %v500
    %v502 = vpop.f32.mrf.mxu0
    %503 = vdwg.mxu0
    %504 = vmatpush.bf16.msra.mxu0 %v400
    %505 = vmatpush.bf16.msra.mxu0 %v399
    %506 = vmatpush.bf16.msra.mxu0 %v398
    %507 = vmatpush.bf16.msra.mxu0 %v397
    %508 = vmatpush.bf16.msra.mxu0 %v396
    %509 = vmatpush.bf16.msra.mxu0 %v395
    %510 = vmatpush.bf16.msra.mxu0 %v394
    %511 = vmatpush.bf16.msra.mxu0 %v393
    %512 = vmatmul.bf16.gmra.mxu0 %v74
    %v513 = vpop.f32.mrf.mxu0
    %v514 = vadd.f32 %v501, %v513
    %v515 = vpop.f32.mrf.mxu0
    %516 = vdwg.mxu0
    %517 = vmatpush.bf16.msra.mxu0 %v408
    %518 = vmatpush.bf16.msra.mxu0 %v407
    %519 = vmatpush.bf16.msra.mxu0 %v406
    %520 = vmatpush.bf16.msra.mxu0 %v405
    %521 = vmatpush.bf16.msra.mxu0 %v404
    %522 = vmatpush.bf16.msra.mxu0 %v403
    %523 = vmatpush.bf16.msra.mxu0 %v402
    %524 = vmatpush.bf16.msra.mxu0 %v401
    %525 = vmatmul.bf16.gmra.mxu0 %v75
    %v526 = vpop.f32.mrf.mxu0
    %v527 = vadd.f32 %v514, %v526
    %v528 = vpop.f32.mrf.mxu0
    %529 = vdwg.mxu0
    %530 = vmatpush.bf16.msra.mxu0 %v416
    %531 = vmatpush.bf16.msra.mxu0 %v415
    %532 = vmatpush.bf16.msra.mxu0 %v414
    %533 = vmatpush.bf16.msra.mxu0 %v413
    %534 = vmatpush.bf16.msra.mxu0 %v412
    %535 = vmatpush.bf16.msra.mxu0 %v411
    %536 = vmatpush.bf16.msra.mxu0 %v410
    %537 = vmatpush.bf16.msra.mxu0 %v409
    %538 = vmatmul.bf16.gmra.mxu0 %v76
    %v539 = vpop.f32.mrf.mxu0
    %v540 = vadd.f32 %v527, %v539
    %v541 = vpop.f32.mrf.mxu0
    %542 = vdwg.mxu0
    %v543 = vmax.f32 %v540, 0.0
    %v544 = vpack.c.bf16 %v543, %v543
    %v545 = vld [vmem:[#allocation6] sm:$0xf]
    %v546 = vld [vmem:[#allocation6 + $0x4] sm:$0xf]
    %v547 = vld [vmem:[#allocation6 + $0x8] sm:$0xf]
    %v548 = vld [vmem:[#allocation6 + $0xc] sm:$0xf]
    %v549 = vld [vmem:[#allocation6 + $0x10] sm:$0xf]
    %v550 = vld [vmem:[#allocation6 + $0x14] sm:$0xf]
    %v551 = vld [vmem:[#allocation6 + $0x18] sm:$0xf]
    %v552 = vld [vmem:[#allocation6 + $0x1c] sm:$0xf]
    %v553 = vld [vmem:[#allocation6 + $0x20] sm:$0xf]
    %v554 = vld [vmem:[#allocation6 + $0x24] sm:$0xf]
    %v555 = vld [vmem:[#allocation6 + $0x28] sm:$0xf]
    %v556 = vld [vmem:[#allocation6 + $0x2c] sm:$0xf]
    %v557 = vld [vmem:[#allocation6 + $0x30] sm:$0xf]
    %v558 = vld [vmem:[#allocation6 + $0x34] sm:$0xf]
    %v559 = vld [vmem:[#allocation6 + $0x38] sm:$0xf]
    %v560 = vld [vmem:[#allocation6 + $0x3c] sm:$0xf]
    %v561 = vld [vmem:[%s4] sm:$0x1]
    %v563 = vperm.slane %v561, 0
    %v581 = vunpack.c.l.b16 %v545
    %v582 = vunpack.c.l.b16 %v546
    %v583 = vunpack.c.l.b16 %v547
    %v584 = vunpack.c.l.b16 %v548
    %v585 = vunpack.c.l.b16 %v549
    %v586 = vunpack.c.l.b16 %v550
    %v587 = vunpack.c.l.b16 %v551
    %v588 = vunpack.c.l.b16 %v552
    %v589 = vunpack.c.l.b16 %v553
    %v590 = vunpack.c.l.b16 %v554
    %v591 = vunpack.c.l.b16 %v555
    %v592 = vunpack.c.l.b16 %v556
    %v593 = vunpack.c.l.b16 %v557
    %v594 = vunpack.c.l.b16 %v558
    %v595 = vunpack.c.l.b16 %v559
    %v596 = vunpack.c.l.b16 %v560
    %v597 = vpack.c.b16 %v582, %v581
    %v598 = vpack.c.b16 %v584, %v583
    %v599 = vpack.c.b16 %v586, %v585
    %v600 = vpack.c.b16 %v588, %v587
    %v601 = vpack.c.b16 %v590, %v589
    %v602 = vpack.c.b16 %v592, %v591
    %v603 = vpack.c.b16 %v594, %v593
    %v604 = vpack.c.b16 %v596, %v595
    %613 = vmatpush.bf16.msra.mxu0 %v604
    %614 = vmatpush.bf16.msra.mxu0 %v603
    %615 = vmatpush.bf16.msra.mxu0 %v602
    %616 = vmatpush.bf16.msra.mxu0 %v601
    %617 = vmatpush.bf16.msra.mxu0 %v600
    %618 = vmatpush.bf16.msra.mxu0 %v599
    %619 = vmatpush.bf16.msra.mxu0 %v598
    %620 = vmatpush.bf16.msra.mxu0 %v597
    %621 = vmatmul.bf16.gmra.mxu0 %v544
    %v622 = vpop.f32.mrf.mxu0
    %v623 = vadd.f32 %v563, %v622
    %v624 = vpop.f32.mrf.mxu0
    %625 = vdwg.mxu0
    %v626 = vpack.c.bf16 %v623, %v623
    %627 = vst [vmem:[%s5] sm:$0xf] %v626
    // Predicated region
    $region34: #{simple_classifier_forward.1} parent=1 // pred_check
      _
    $region35: #{simple_classifier_forward.1} parent=1 // pred_check_branch
      %629 = sbr.rel (0) target = $region37
    $region36: #{simple_classifier_forward.1} parent=1 // pred_region
      _
    $region37: #{simple_classifier_forward.1} parent=1 // pred_fallthru
      _
    // Predicated region
    $region38: #{simple_classifier_forward.1} parent=1 // pred_check
      _
    $region39: #{simple_classifier_forward.1} parent=1 // pred_check_branch
      %631 = sbr.rel (0) target = $region41
    $region40: #{simple_classifier_forward.1} parent=1 // pred_region
      _
    $region41: #{simple_classifier_forward.1} parent=1 // pred_fallthru
      _
    %632 = vsyncpa [#allocation3], 1
    %633 = vsyncpa [#allocation5], 1

</llo_original>
